<compile_context>
chip_gen: v5e
topology: v5e:2x2
jax: 0.10.0
libtpu: 0.0.40
codegen_flags: <defaults>
</compile_context>

<pallas_src>
import functools

import jax
import jax.numpy as jnp
from jax.experimental import pallas as pl
from jax.experimental.pallas import tpu as pltpu

LANE = 128  # TPU lane width; output is padded to this many columns.


def _qnet_kernel(x_ref, w1_ref, b1_ref, w2_ref, b2_ref, w3_ref, b3_ref, o_ref):
    """Fused MLP forward: relu(x@W1+b1) -> relu(.@W2+b2) -> .@W3+b3.

    x/W* refs hold bf16; biases and accumulation are f32; ReLU in f32.
    """
    x = x_ref[...]                                                   # bf16 (block_b, S)

    h1 = jnp.dot(x, w1_ref[...], preferred_element_type=jnp.float32) + b1_ref[...]
    h1 = jnp.maximum(h1, 0.0).astype(jnp.bfloat16)                   # (block_b, F1)

    h2 = jnp.dot(h1, w2_ref[...], preferred_element_type=jnp.float32) + b2_ref[...]
    h2 = jnp.maximum(h2, 0.0).astype(jnp.bfloat16)                   # (block_b, F2)

    out = jnp.dot(h2, w3_ref[...], preferred_element_type=jnp.float32) + b3_ref[...]
    o_ref[...] = out.astype(o_ref.dtype)                             # (block_b, 128)


@functools.partial(jax.jit, static_argnames=("block_b",))
def qnetwork_forward(state, params, *, block_b=256):
    """state: (B, state_size) float32; params: dict of weights/biases.

    Returns (B, action_size) float32 Q-values.
    """
    w1 = params["w1"].astype(jnp.bfloat16)
    w2 = params["w2"].astype(jnp.bfloat16)
    w3 = params["w3"].astype(jnp.bfloat16)
    b1 = params["b1"].astype(jnp.float32)
    b2 = params["b2"].astype(jnp.float32)
    b3 = params["b3"].astype(jnp.float32)

    B, state_size = state.shape
    fc1_units = w1.shape[1]
    fc2_units = w2.shape[1]
    action_size = w3.shape[1]

    # ---- Pad batch to a multiple of block_b (tail handled by zero rows). ----
    num_blocks = max(int(pl.cdiv(B, block_b)), 1)
    b_pad = num_blocks * block_b
    x = state.astype(jnp.bfloat16)
    if b_pad != B:
        x = jnp.pad(x, ((0, b_pad - B), (0, 0)))

    # ---- Lane-dense output: pad last layer to 128 output columns. ----------
    n_pad = LANE * max(int(pl.cdiv(action_size, LANE)), 1)
    w3p = jnp.zeros((fc2_units, n_pad), jnp.bfloat16).at[:, :action_size].set(w3)
    b3p = jnp.zeros((1, n_pad), jnp.float32).at[:, :action_size].set(b3)

    flops = 2 * b_pad * (state_size * fc1_units
                         + fc1_units * fc2_units
                         + fc2_units * n_pad)
    bytes_accessed = (
        b_pad * state_size * 2                      # x (bf16)
        + b_pad * n_pad * 4                         # out (f32)
        + (state_size * fc1_units + fc1_units * fc2_units + fc2_units * n_pad) * 2
        + (fc1_units + fc2_units + n_pad) * 4       # biases (f32)
    )

    out_padded = pl.pallas_call(
        _qnet_kernel,
        out_shape=jax.ShapeDtypeStruct((b_pad, n_pad), jnp.float32),
        grid_spec=pl.GridSpec(
            grid=(num_blocks,),
            in_specs=[
                pl.BlockSpec((block_b, state_size), lambda i: (i, 0)),    # x
                # Weights/biases: constant block index -> stay VMEM-resident.
                pl.BlockSpec((state_size, fc1_units), lambda i: (0, 0)),  # w1
                pl.BlockSpec((1, fc1_units), lambda i: (0, 0)),           # b1
                pl.BlockSpec((fc1_units, fc2_units), lambda i: (0, 0)),   # w2
                pl.BlockSpec((1, fc2_units), lambda i: (0, 0)),           # b2
                pl.BlockSpec((fc2_units, n_pad), lambda i: (0, 0)),       # w3 (padded)
                pl.BlockSpec((1, n_pad), lambda i: (0, 0)),               # b3 (padded)
            ],
            out_specs=pl.BlockSpec((block_b, n_pad), lambda i: (i, 0)),
        ),
        compiler_params=pltpu.CompilerParams(
            dimension_semantics=("parallel",),  # megacore sharding on v7x
        ),
        cost_estimate=pl.CostEstimate(
            flops=flops, transcendentals=0, bytes_accessed=bytes_accessed),
    )(x, w1, b1, w2, b2, w3p, b3p)

    return out_padded[:B, :action_size]


def init_qnetwork_params(key, state_size, action_size, fc1_units=64, fc2_units=64):
    """Init mimicking PyTorch nn.Linear default (U[-1/sqrt(fan_in), +])."""
    def linear_init(k, fan_in, fan_out):
        kw, kb = jax.random.split(k)
        bound = 1.0 / jnp.sqrt(fan_in)
        w = jax.random.uniform(kw, (fan_in, fan_out), jnp.float32, -bound, bound)
        b = jax.random.uniform(kb, (1, fan_out), jnp.float32, -bound, bound)
        return w, b

    k1, k2, k3 = jax.random.split(key, 3)
    w1, b1 = linear_init(k1, state_size, fc1_units)
    w2, b2 = linear_init(k2, fc1_units, fc2_units)
    w3, b3 = linear_init(k3, fc2_units, action_size)
    return {"w1": w1, "b1": b1, "w2": w2, "b2": b2, "w3": w3, "b3": b3}


def qnetwork_reference_f32(state, params):
    """Pure-f32 JAX reference."""
    h1 = jnp.maximum(state @ params["w1"] + params["b1"], 0.0)
    h2 = jnp.maximum(h1 @ params["w2"] + params["b2"], 0.0)
    return h2 @ params["w3"] + params["b3"]


def qnetwork_reference_bf16(state, params):
    """Reference matching the kernel's bf16-matmul / f32-accumulate semantics."""
    x = state.astype(jnp.bfloat16)
    w1 = params["w1"].astype(jnp.bfloat16)
    w2 = params["w2"].astype(jnp.bfloat16)
    w3 = params["w3"].astype(jnp.bfloat16)
    h1 = jnp.maximum(
        jnp.dot(x, w1, preferred_element_type=jnp.float32) + params["b1"], 0.0
    ).astype(jnp.bfloat16)
    h2 = jnp.maximum(
        jnp.dot(h1, w2, preferred_element_type=jnp.float32) + params["b2"], 0.0
    ).astype(jnp.bfloat16)
    return jnp.dot(h2, w3, preferred_element_type=jnp.float32) + params["b3"]


if __name__ == "__main__":
    key = jax.random.PRNGKey(0)
    k_param, k_state = jax.random.split(key)

    state_size = 8
    action_size = 4
    fc1_units = 64
    fc2_units = 64

    params = init_qnetwork_params(k_param, state_size, action_size,
                                  fc1_units, fc2_units)

    # Case 1: batch = 512 with block_b = 256 -> grid of 2 parallel steps
    # (keeps both TensorCores busy on v7x).
    batch = 512
    state = jax.random.normal(k_state, (batch, state_size), jnp.float32)
    out = jax.block_until_ready(qnetwork_forward(state, params, block_b=256))
    assert out.shape == (batch, action_size)
    ref_bf16 = qnetwork_reference_bf16(state, params)
    ref_f32 = qnetwork_reference_f32(state, params)
    assert jnp.allclose(out, ref_bf16, atol=1e-2, rtol=1e-2), "mismatch vs bf16 reference"
    assert jnp.allclose(out, ref_f32, atol=5e-2, rtol=5e-2), "mismatch vs f32 reference"

    # Case 2: ragged batch (exercises the zero-pad tail path).
    batch2 = 100
    state2 = jax.random.normal(jax.random.PRNGKey(7), (batch2, state_size), jnp.float32)
    out2 = jax.block_until_ready(qnetwork_forward(state2, params, block_b=256))
    assert out2.shape == (batch2, action_size)
    ref2 = qnetwork_reference_bf16(state2, params)
    assert jnp.allclose(out2, ref2, atol=1e-2, rtol=1e-2), "mismatch vs reference (ragged batch)"

    print("KERNEL_OK")
</pallas_src>

<mosaic_0001>
module attributes {stable_mosaic.version = 11 : i64} {
  func.func @_qnet_kernel(%arg0: i32, %arg1: memref<256x8xbf16, #tpu.memory_space<vmem>>, %arg2: memref<8x64xbf16, #tpu.memory_space<vmem>>, %arg3: memref<1x64xf32, #tpu.memory_space<vmem>>, %arg4: memref<64x64xbf16, #tpu.memory_space<vmem>>, %arg5: memref<1x64xf32, #tpu.memory_space<vmem>>, %arg6: memref<64x128xbf16, #tpu.memory_space<vmem>>, %arg7: memref<1x128xf32, #tpu.memory_space<vmem>>, %arg8: memref<256x128xf32, #tpu.memory_space<vmem>>) attributes {dimension_semantics = [#tpu.dimension_semantics<parallel>], iteration_bounds = array<i64: 2>, scalar_prefetch = 0 : i64, scratch_operands = 0 : i64, tpu.core_type = #tpu.core_type<tc>, window_params = [{transform_indices = @transform_0, window_bounds = array<i64: 256, 8>}, {pipeline_mode = #tpu.pipeline_mode<synchronous>, transform_indices = @transform_1, window_bounds = array<i64: 8, 64>}, {pipeline_mode = #tpu.pipeline_mode<synchronous>, transform_indices = @transform_2, window_bounds = array<i64: 1, 64>}, {pipeline_mode = #tpu.pipeline_mode<synchronous>, transform_indices = @transform_3, window_bounds = array<i64: 64, 64>}, {pipeline_mode = #tpu.pipeline_mode<synchronous>, transform_indices = @transform_4, window_bounds = array<i64: 1, 64>}, {pipeline_mode = #tpu.pipeline_mode<synchronous>, transform_indices = @transform_5, window_bounds = array<i64: 64, 128>}, {pipeline_mode = #tpu.pipeline_mode<synchronous>, transform_indices = @transform_6, window_bounds = array<i64: 1, 128>}, {transform_indices = @transform_7, window_bounds = array<i64: 256, 128>}]} {
    %c0 = arith.constant 0 : index
    %c0_0 = arith.constant 0 : index
    %0 = vector.load %arg1[%c0, %c0_0] : memref<256x8xbf16, #tpu.memory_space<vmem>>, vector<256x8xbf16>
    %c0_1 = arith.constant 0 : index
    %c0_2 = arith.constant 0 : index
    %1 = vector.load %arg2[%c0_1, %c0_2] : memref<8x64xbf16, #tpu.memory_space<vmem>>, vector<8x64xbf16>
    %cst = arith.constant dense<0.000000e+00> : vector<256x64xf32>
    %2 = tpu.matmul %0, %1, %cst {dimension_numbers = #tpu.dot_dimension_numbers<[1], [0], [0], [1], [0, 0, 1, 1], [], []>} : vector<256x8xbf16>, vector<8x64xbf16>, vector<256x64xf32> -> vector<256x64xf32>
    %c0_3 = arith.constant 0 : index
    %c0_4 = arith.constant 0 : index
    %3 = vector.load %arg3[%c0_3, %c0_4] : memref<1x64xf32, #tpu.memory_space<vmem>>, vector<1x64xf32>
    %4 = vector.broadcast %3 : vector<1x64xf32> to vector<256x64xf32>
    %5 = arith.addf %2, %4 : vector<256x64xf32>
    %cst_5 = arith.constant 0.000000e+00 : f32
    %6 = vector.broadcast %cst_5 : f32 to vector<256x64xf32>
    %7 = arith.maximumf %5, %6 : vector<256x64xf32>
    %8 = arith.truncf %7 : vector<256x64xf32> to vector<256x64xbf16>
    %c0_6 = arith.constant 0 : index
    %c0_7 = arith.constant 0 : index
    %9 = vector.load %arg4[%c0_6, %c0_7] : memref<64x64xbf16, #tpu.memory_space<vmem>>, vector<64x64xbf16>
    %cst_8 = arith.constant dense<0.000000e+00> : vector<256x64xf32>
    %10 = tpu.matmul %8, %9, %cst_8 {dimension_numbers = #tpu.dot_dimension_numbers<[1], [0], [0], [1], [0, 0, 1, 1], [], []>} : vector<256x64xbf16>, vector<64x64xbf16>, vector<256x64xf32> -> vector<256x64xf32>
    %c0_9 = arith.constant 0 : index
    %c0_10 = arith.constant 0 : index
    %11 = vector.load %arg5[%c0_9, %c0_10] : memref<1x64xf32, #tpu.memory_space<vmem>>, vector<1x64xf32>
    %12 = vector.broadcast %11 : vector<1x64xf32> to vector<256x64xf32>
    %13 = arith.addf %10, %12 : vector<256x64xf32>
    %cst_11 = arith.constant 0.000000e+00 : f32
    %14 = vector.broadcast %cst_11 : f32 to vector<256x64xf32>
    %15 = arith.maximumf %13, %14 : vector<256x64xf32>
    %16 = arith.truncf %15 : vector<256x64xf32> to vector<256x64xbf16>
    %c0_12 = arith.constant 0 : index
    %c0_13 = arith.constant 0 : index
    %17 = vector.load %arg6[%c0_12, %c0_13] : memref<64x128xbf16, #tpu.memory_space<vmem>>, vector<64x128xbf16>
    %cst_14 = arith.constant dense<0.000000e+00> : vector<256x128xf32>
    %18 = tpu.matmul %16, %17, %cst_14 {dimension_numbers = #tpu.dot_dimension_numbers<[1], [0], [0], [1], [0, 0, 1, 1], [], []>} : vector<256x64xbf16>, vector<64x128xbf16>, vector<256x128xf32> -> vector<256x128xf32>
    %c0_15 = arith.constant 0 : index
    %c0_16 = arith.constant 0 : index
    %19 = vector.load %arg7[%c0_15, %c0_16] : memref<1x128xf32, #tpu.memory_space<vmem>>, vector<1x128xf32>
    %20 = vector.broadcast %19 : vector<1x128xf32> to vector<256x128xf32>
    %21 = arith.addf %18, %20 : vector<256x128xf32>
    %c0_17 = arith.constant 0 : index
    %c0_18 = arith.constant 0 : index
    %22 = vector.load %arg8[%c0_17, %c0_18] : memref<256x128xf32, #tpu.memory_space<vmem>>, vector<256x128xf32>
    tpu.vector_store %arg8[%c0_17, %c0_18], %21 {strides = array<i32>} : memref<256x128xf32, #tpu.memory_space<vmem>>, vector<256x128xf32>,
    return
  }
  func.func @transform_0(%arg0: i32) -> (i32, i32) {
    %c0_i32 = arith.constant 0 : i32
    %c0_i32_0 = arith.constant 0 : i32
    return %arg0, %c0_i32 : i32, i32
  }
  func.func @transform_1(%arg0: i32) -> (i32, i32) {
    %c0_i32 = arith.constant 0 : i32
    %c0_i32_0 = arith.constant 0 : i32
    %c0_i32_1 = arith.constant 0 : i32
    return %c0_i32, %c0_i32_0 : i32, i32
  }
  func.func @transform_2(%arg0: i32) -> (i32, i32) {
    %c0_i32 = arith.constant 0 : i32
    %c0_i32_0 = arith.constant 0 : i32
    %c0_i32_1 = arith.constant 0 : i32
    return %c0_i32, %c0_i32_0 : i32, i32
  }
  func.func @transform_3(%arg0: i32) -> (i32, i32) {
    %c0_i32 = arith.constant 0 : i32
    %c0_i32_0 = arith.constant 0 : i32
    %c0_i32_1 = arith.constant 0 : i32
    return %c0_i32, %c0_i32_0 : i32, i32
  }
  func.func @transform_4(%arg0: i32) -> (i32, i32) {
    %c0_i32 = arith.constant 0 : i32
    %c0_i32_0 = arith.constant 0 : i32
    %c0_i32_1 = arith.constant 0 : i32
    return %c0_i32, %c0_i32_0 : i32, i32
  }
  func.func @transform_5(%arg0: i32) -> (i32, i32) {
    %c0_i32 = arith.constant 0 : i32
    %c0_i32_0 = arith.constant 0 : i32
    %c0_i32_1 = arith.constant 0 : i32
    return %c0_i32, %c0_i32_0 : i32, i32
  }
  func.func @transform_6(%arg0: i32) -> (i32, i32) {
    %c0_i32 = arith.constant 0 : i32
    %c0_i32_0 = arith.constant 0 : i32
    %c0_i32_1 = arith.constant 0 : i32
    return %c0_i32, %c0_i32_0 : i32, i32
  }
  func.func @transform_7(%arg0: i32) -> (i32, i32) {
    %c0_i32 = arith.constant 0 : i32
    %c0_i32_0 = arith.constant 0 : i32
    return %arg0, %c0_i32 : i32, i32
  }
}

</mosaic_0001>

<llo_original>
// kernel: qnetwork_forward.1
$region0: #{qnetwork_forward.1}
  #allocation0 [shape = 'u32[]', space=smem, size = 0x4, offset = 0x4, fixed_abs, tag = 'smem constant byte address 0x4 - core index']
  #allocation1 [shape = 'u32[72,128]{1,0:T(1,128)}', space=vmem, size = 0x9000, scoped, tag = 'internal scratch']
  %s0 = inlined_call_operand.vmem [shape: bf16[512,8], index: 0, kind: input, shape index: {}]
  %s1 = inlined_call_operand.vmem [shape: bf16[8,64], index: 1, kind: input, shape index: {}]
  %s2 = inlined_call_operand.vmem [shape: f32[1,64], index: 2, kind: input, shape index: {}]
  %s3 = inlined_call_operand.vmem [shape: bf16[64,64], index: 3, kind: input, shape index: {}]
  %s4 = inlined_call_operand.vmem [shape: f32[1,64], index: 4, kind: input, shape index: {}]
  %s5 = inlined_call_operand.vmem [shape: bf16[64,128], index: 5, kind: input, shape index: {}]
  %s6 = inlined_call_operand.vmem [shape: f32[1,128], index: 6, kind: input, shape index: {}]
  %s7 = inlined_call_operand.vmem [shape: f32[512,128], index: 7, kind: output, shape index: {}]
  %s8 = sld [smem:[#allocation0]]
  $region61: #{qnetwork_forward.1} parent=0
    _
  %s10 = ssub.s32 1, %s8
  %s11 = scalar_select 0, %s10, %s8
  loop: start=0, step=1, limit=4
  $region2: #{qnetwork_forward.1} parent=0 // loop_pre_header
    _
  $region3: #{qnetwork_forward.1} parent=0 // loop_header
    %s13 = sphi 0, %s17
    %p14 = scmp.ge.s32.totalorder %s13, 4
    %s23 = sphi 0, %s25
    %s26 = sphi 0, %s23
    %s27 = sphi 0, %s26
    %s43 = sphi 0, %s27
    %s47 = sphi 0, %s47
    %s49 = sphi 0, %s47
    %s50 = sphi 0, %s49
    %s64 = sphi 0, %s50
    %s68 = sphi 0, %s68
    %s70 = sphi 0, %s68
    %s71 = sphi 0, %s70
    %s85 = sphi 0, %s71
    %s89 = sphi 0, %s89
    %s91 = sphi 0, %s89
    %s92 = sphi 0, %s91
    %s106 = sphi 0, %s92
    %s110 = sphi 0, %s110
    %s112 = sphi 0, %s110
    %s113 = sphi 0, %s112
    %s127 = sphi 0, %s113
    %s131 = sphi 0, %s131
    %s133 = sphi 0, %s131
    %s134 = sphi 0, %s133
    %s148 = sphi 0, %s134
    %s152 = sphi 0, %s152
    %s154 = sphi 0, %s152
    %s155 = sphi 0, %s154
    %s169 = sphi 0, %s155
    %s175 = sphi 0, %s177
    %s178 = sphi 0, %s175
    %s179 = sphi 0, %s178
    %s195 = sphi 0, %s179
  $region4: #{qnetwork_forward.1} parent=0 // loop_header_branch
    %16 = sbr.rel (%p14) target = $region8
  $region5: #{qnetwork_forward.1} parent=0 // loop_body
    %s18 = ssub.s32 %s13, 1
    %s19 = ssub.s32 %s13, 2
    %s20 = sadd.s32 %s13, 1
    %s21 = ssub.s32 %s13, %s20
    %p22 = scmp.eq.s32.totalorder %s21, 0
    %s24 = sadd.s32 %s23, 1
    %s25 = scalar_select %p22, %s23, %s24
    %p28 = pneg %p22
    %p29 = scmp.eq.s32.totalorder %s13, 1
    %p30 = por %p28, %p29
    %p31 = scmp.ne.s32.totalorder %s23, %s26
    %p32 = scmp.eq.s32.totalorder %s13, 0
    %p33 = por %p31, %p32
    %p34 = scmp.ne.s32.totalorder %s23, %s26
    %p35 = scmp.eq.s32.totalorder %s18, 1
    %p36 = por %p34, %p35
    %p37 = scmp.ne.s32.totalorder %s26, %s27
    %p38 = scmp.eq.s32.totalorder %s18, 0
    %p39 = por %p37, %p38
    %p40 = scmp.ne.s32.totalorder %s26, %s27
    %p41 = scmp.eq.s32.totalorder %s19, 1
    %p42 = por %p40, %p41
    %p44 = scmp.ne.s32.totalorder %s27, %s43
    %p45 = scmp.eq.s32.totalorder %s19, 0
    %p46 = por %p44, %p45
    %s48 = sadd.s32 %s47, 1
    %p51 = scmp.eq.s32.totalorder %s13, 1
    %p52 = scmp.ne.s32.totalorder %s47, %s49
    %p53 = scmp.eq.s32.totalorder %s13, 0
    %p54 = por %p52, %p53
    %p55 = scmp.ne.s32.totalorder %s47, %s49
    %p56 = scmp.eq.s32.totalorder %s18, 1
    %p57 = por %p55, %p56
    %p58 = scmp.ne.s32.totalorder %s49, %s50
    %p59 = scmp.eq.s32.totalorder %s18, 0
    %p60 = por %p58, %p59
    %p61 = scmp.ne.s32.totalorder %s49, %s50
    %p62 = scmp.eq.s32.totalorder %s19, 1
    %p63 = por %p61, %p62
    %p65 = scmp.ne.s32.totalorder %s50, %s64
    %p66 = scmp.eq.s32.totalorder %s19, 0
    %p67 = por %p65, %p66
    %s69 = sadd.s32 %s68, 1
    %p72 = scmp.eq.s32.totalorder %s13, 1
    %p73 = scmp.ne.s32.totalorder %s68, %s70
    %p74 = scmp.eq.s32.totalorder %s13, 0
    %p75 = por %p73, %p74
    %p76 = scmp.ne.s32.totalorder %s68, %s70
    %p77 = scmp.eq.s32.totalorder %s18, 1
    %p78 = por %p76, %p77
    %p79 = scmp.ne.s32.totalorder %s70, %s71
    %p80 = scmp.eq.s32.totalorder %s18, 0
    %p81 = por %p79, %p80
    %p82 = scmp.ne.s32.totalorder %s70, %s71
    %p83 = scmp.eq.s32.totalorder %s19, 1
    %p84 = por %p82, %p83
    %p86 = scmp.ne.s32.totalorder %s71, %s85
    %p87 = scmp.eq.s32.totalorder %s19, 0
    %p88 = por %p86, %p87
    %s90 = sadd.s32 %s89, 1
    %p93 = scmp.eq.s32.totalorder %s13, 1
    %p94 = scmp.ne.s32.totalorder %s89, %s91
    %p95 = scmp.eq.s32.totalorder %s13, 0
    %p96 = por %p94, %p95
    %p97 = scmp.ne.s32.totalorder %s89, %s91
    %p98 = scmp.eq.s32.totalorder %s18, 1
    %p99 = por %p97, %p98
    %p100 = scmp.ne.s32.totalorder %s91, %s92
    %p101 = scmp.eq.s32.totalorder %s18, 0
    %p102 = por %p100, %p101
    %p103 = scmp.ne.s32.totalorder %s91, %s92
    %p104 = scmp.eq.s32.totalorder %s19, 1
    %p105 = por %p103, %p104
    %p107 = scmp.ne.s32.totalorder %s92, %s106
    %p108 = scmp.eq.s32.totalorder %s19, 0
    %p109 = por %p107, %p108
    %s111 = sadd.s32 %s110, 1
    %p114 = scmp.eq.s32.totalorder %s13, 1
    %p115 = scmp.ne.s32.totalorder %s110, %s112
    %p116 = scmp.eq.s32.totalorder %s13, 0
    %p117 = por %p115, %p116
    %p118 = scmp.ne.s32.totalorder %s110, %s112
    %p119 = scmp.eq.s32.totalorder %s18, 1
    %p120 = por %p118, %p119
    %p121 = scmp.ne.s32.totalorder %s112, %s113
    %p122 = scmp.eq.s32.totalorder %s18, 0
    %p123 = por %p121, %p122
    %p124 = scmp.ne.s32.totalorder %s112, %s113
    %p125 = scmp.eq.s32.totalorder %s19, 1
    %p126 = por %p124, %p125
    %p128 = scmp.ne.s32.totalorder %s113, %s127
    %p129 = scmp.eq.s32.totalorder %s19, 0
    %p130 = por %p128, %p129
    %s132 = sadd.s32 %s131, 1
    %p135 = scmp.eq.s32.totalorder %s13, 1
    %p136 = scmp.ne.s32.totalorder %s131, %s133
    %p137 = scmp.eq.s32.totalorder %s13, 0
    %p138 = por %p136, %p137
    %p139 = scmp.ne.s32.totalorder %s131, %s133
    %p140 = scmp.eq.s32.totalorder %s18, 1
    %p141 = por %p139, %p140
    %p142 = scmp.ne.s32.totalorder %s133, %s134
    %p143 = scmp.eq.s32.totalorder %s18, 0
    %p144 = por %p142, %p143
    %p145 = scmp.ne.s32.totalorder %s133, %s134
    %p146 = scmp.eq.s32.totalorder %s19, 1
    %p147 = por %p145, %p146
    %p149 = scmp.ne.s32.totalorder %s134, %s148
    %p150 = scmp.eq.s32.totalorder %s19, 0
    %p151 = por %p149, %p150
    %s153 = sadd.s32 %s152, 1
    %p156 = scmp.eq.s32.totalorder %s13, 1
    %p157 = scmp.ne.s32.totalorder %s152, %s154
    %p158 = scmp.eq.s32.totalorder %s13, 0
    %p159 = por %p157, %p158
    %p160 = scmp.ne.s32.totalorder %s152, %s154
    %p161 = scmp.eq.s32.totalorder %s18, 1
    %p162 = por %p160, %p161
    %p163 = scmp.ne.s32.totalorder %s154, %s155
    %p164 = scmp.eq.s32.totalorder %s18, 0
    %p165 = por %p163, %p164
    %p166 = scmp.ne.s32.totalorder %s154, %s155
    %p167 = scmp.eq.s32.totalorder %s19, 1
    %p168 = por %p166, %p167
    %p170 = scmp.ne.s32.totalorder %s155, %s169
    %p171 = scmp.eq.s32.totalorder %s19, 0
    %p172 = por %p170, %p171
    %s173 = ssub.s32 %s13, %s20
    %p174 = scmp.eq.s32.totalorder %s173, 0
    %s176 = sadd.s32 %s175, 1
    %s177 = scalar_select %p174, %s175, %s176
    %p180 = pneg %p174
    %p181 = scmp.eq.s32.totalorder %s13, 1
    %p182 = por %p180, %p181
    %p183 = scmp.ne.s32.totalorder %s175, %s178
    %p184 = scmp.eq.s32.totalorder %s13, 0
    %p185 = por %p183, %p184
    %p186 = scmp.ne.s32.totalorder %s175, %s178
    %p187 = scmp.eq.s32.totalorder %s18, 1
    %p188 = por %p186, %p187
    %p189 = scmp.ne.s32.totalorder %s178, %s179
    %p190 = scmp.eq.s32.totalorder %s18, 0
    %p191 = por %p189, %p190
    %p192 = scmp.ne.s32.totalorder %s178, %s179
    %p193 = scmp.eq.s32.totalorder %s19, 1
    %p194 = por %p192, %p193
    %p196 = scmp.ne.s32.totalorder %s179, %s195
    %p197 = scmp.eq.s32.totalorder %s19, 0
    %p198 = por %p196, %p197
    %p199 = scmp.le.s32.totalorder 1, %s13
    %p200 = scmp.lt.s32.totalorder %s13, 3
    %p201 = pnand %p199, %p200
    %p202 = pneg %p201
    // Predicated region
    $region9: #{qnetwork_forward.1} parent=5 // pred_check
      _
    $region10: #{qnetwork_forward.1} parent=5 // pred_check_branch
      %204 = sbr.rel (%p201) target = $region12
    $region11: #{qnetwork_forward.1} parent=5 // pred_region
      %s205 = ssub.s32 %s13, 1
      // Predicated region
      $region13: #{qnetwork_forward.1} parent=11 // pred_check
        %p206 = pneg %p60
      $region14: #{qnetwork_forward.1} parent=11 // pred_check_branch
        %208 = sbr.rel (%p206) target = $region16
      $region15: #{qnetwork_forward.1} parent=11 // pred_region
        _
      $region16: #{qnetwork_forward.1} parent=11 // pred_fallthru
        _
      // Predicated region
      $region17: #{qnetwork_forward.1} parent=11 // pred_check
        %p209 = pneg %p81
      $region18: #{qnetwork_forward.1} parent=11 // pred_check_branch
        %211 = sbr.rel (%p209) target = $region20
      $region19: #{qnetwork_forward.1} parent=11 // pred_region
        _
      $region20: #{qnetwork_forward.1} parent=11 // pred_fallthru
        _
      // Predicated region
      $region21: #{qnetwork_forward.1} parent=11 // pred_check
        %p212 = pneg %p102
      $region22: #{qnetwork_forward.1} parent=11 // pred_check_branch
        %214 = sbr.rel (%p212) target = $region24
      $region23: #{qnetwork_forward.1} parent=11 // pred_region
        _
      $region24: #{qnetwork_forward.1} parent=11 // pred_fallthru
        _
      // Predicated region
      $region25: #{qnetwork_forward.1} parent=11 // pred_check
        %p215 = pneg %p123
      $region26: #{qnetwork_forward.1} parent=11 // pred_check_branch
        %217 = sbr.rel (%p215) target = $region28
      $region27: #{qnetwork_forward.1} parent=11 // pred_region
        _
      $region28: #{qnetwork_forward.1} parent=11 // pred_fallthru
        _
      // Predicated region
      $region29: #{qnetwork_forward.1} parent=11 // pred_check
        %p218 = pneg %p144
      $region30: #{qnetwork_forward.1} parent=11 // pred_check_branch
        %220 = sbr.rel (%p218) target = $region32
      $region31: #{qnetwork_forward.1} parent=11 // pred_region
        _
      $region32: #{qnetwork_forward.1} parent=11 // pred_fallthru
        _
      // Predicated region
      $region33: #{qnetwork_forward.1} parent=11 // pred_check
        %p221 = pneg %p165
      $region34: #{qnetwork_forward.1} parent=11 // pred_check_branch
        %223 = sbr.rel (%p221) target = $region36
      $region35: #{qnetwork_forward.1} parent=11 // pred_region
        _
      $region36: #{qnetwork_forward.1} parent=11 // pred_fallthru
        _
    $region12: #{qnetwork_forward.1} parent=5 // pred_fallthru
      _
    %p224 = scmp.lt.s32.totalorder %s13, 2
    // Predicated region
    $region37: #{qnetwork_forward.1} parent=5 // pred_check
      %p225 = pneg %p224
    $region38: #{qnetwork_forward.1} parent=5 // pred_check_branch
      %227 = sbr.rel (%p225) target = $region40
    $region39: #{qnetwork_forward.1} parent=5 // pred_region
      // Predicated region
      $region41: #{qnetwork_forward.1} parent=39 // pred_check
        %p228 = pneg %p33
      $region42: #{qnetwork_forward.1} parent=39 // pred_check_branch
        %230 = sbr.rel (%p228) target = $region44
      $region43: #{qnetwork_forward.1} parent=39 // pred_region
        %s231 = smul.u32 32, %s13
        %p232 = scmp.lt.s32.totalorder %s231, 63
        %s233 = scalar_select %p232, %s231, 63
        %s234 = smul.addr %s233, 4
        %s235 = scalar_lea.vmem %s0, %s234
        %s236 = smul.u32 32, %s13
      $region44: #{qnetwork_forward.1} parent=39 // pred_fallthru
        _
    $region40: #{qnetwork_forward.1} parent=5 // pred_fallthru
      _
    %p237 = scmp.le.s32.totalorder 1, %s13
    %p238 = scmp.lt.s32.totalorder %s13, 3
    %p239 = pnand %p237, %p238
    %p240 = pneg %p239
    // Predicated region
    $region45: #{qnetwork_forward.1} parent=5 // pred_check
      _
    $region46: #{qnetwork_forward.1} parent=5 // pred_check_branch
      %242 = sbr.rel (%p239) target = $region48
    $region47: #{qnetwork_forward.1} parent=5 // pred_region
      %s243 = ssub.s32 %s13, 1
      %s244 = smul.u32 32, %s18
      %p245 = scmp.lt.s32.totalorder %s244, 63
      %s246 = scalar_select %p245, %s244, 63
      %s247 = smul.addr %s246, 4
      %s248 = scalar_lea.vmem %s0, %s247
      %p249 = pneg %p39
      %p250 = pneg %p36
      %p251 = pneg %p60
      %p252 = pneg %p57
      %p253 = pneg %p81
      %p254 = pneg %p78
      %p255 = pneg %p102
      %p256 = pneg %p99
      %p257 = pneg %p123
      %p258 = pneg %p120
      %p259 = pneg %p144
      %p260 = pneg %p141
      %p261 = pneg %p165
      %p262 = pneg %p162
      %p263 = pneg %p191
      %p264 = pneg %p188
      %s265 = smul.u32 32, %s18
      %p266 = scmp.lt.s32.totalorder %s265, 63
      %s267 = scalar_select %p266, %s265, 63
      %s268 = smul.addr %s267, 8
      %s269 = scalar_lea.vmem %s7, %s268
      %s270 = smul.u32 32, %s18
      %p271 = scmp.lt.s32.totalorder %s270, 63
      %s272 = scalar_select %p271, %s270, 63
      %s273 = smul.addr %s272, 4
      %s274 = scalar_lea.vmem %s0, %s273
      %s275 = smul.u32 32, %s18
      %s276 = smul.u32 32, %s18
      %p277 = scmp.lt.s32.totalorder %s276, 63
      %s278 = scalar_select %p277, %s276, 63
      %s279 = smul.addr %s278, 8
      %s280 = scalar_lea.vmem %s7, %s279
      %s281 = smul.u32 32, %s18
      %v283 = vld [vmem:[%s274] sm:$0xf]
      %v284 = vld [vmem:[%s274 + $0x4] sm:$0xf]
      %v285 = vld [vmem:[%s274 + $0x8] sm:$0xf]
      %v286 = vld [vmem:[%s274 + $0xc] sm:$0xf]
      %v287 = vld [vmem:[%s274 + $0x10] sm:$0xf]
      %v288 = vld [vmem:[%s274 + $0x14] sm:$0xf]
      %v289 = vld [vmem:[%s274 + $0x18] sm:$0xf]
      %v290 = vld [vmem:[%s274 + $0x1c] sm:$0xf]
      %v291 = vld [vmem:[%s274 + $0x20] sm:$0xf]
      %v292 = vld [vmem:[%s274 + $0x24] sm:$0xf]
      %v293 = vld [vmem:[%s274 + $0x28] sm:$0xf]
      %v294 = vld [vmem:[%s274 + $0x2c] sm:$0xf]
      %v295 = vld [vmem:[%s274 + $0x30] sm:$0xf]
      %v296 = vld [vmem:[%s274 + $0x34] sm:$0xf]
      %v297 = vld [vmem:[%s274 + $0x38] sm:$0xf]
      %v298 = vld [vmem:[%s274 + $0x3c] sm:$0xf]
      %v299 = vld [vmem:[%s274 + $0x40] sm:$0xf]
      %v300 = vld [vmem:[%s274 + $0x44] sm:$0xf]
      %v301 = vld [vmem:[%s274 + $0x48] sm:$0xf]
      %v302 = vld [vmem:[%s274 + $0x4c] sm:$0xf]
      %v303 = vld [vmem:[%s274 + $0x50] sm:$0xf]
      %v304 = vld [vmem:[%s274 + $0x54] sm:$0xf]
      %v305 = vld [vmem:[%s274 + $0x58] sm:$0xf]
      %v306 = vld [vmem:[%s274 + $0x5c] sm:$0xf]
      %v307 = vld [vmem:[%s274 + $0x60] sm:$0xf]
      %v308 = vld [vmem:[%s274 + $0x64] sm:$0xf]
      %v309 = vld [vmem:[%s274 + $0x68] sm:$0xf]
      %v310 = vld [vmem:[%s274 + $0x6c] sm:$0xf]
      %v311 = vld [vmem:[%s274 + $0x70] sm:$0xf]
      %v312 = vld [vmem:[%s274 + $0x74] sm:$0xf]
      %v313 = vld [vmem:[%s274 + $0x78] sm:$0xf]
      %v314 = vld [vmem:[%s274 + $0x7c] sm:$0xf]
      %v315 = vld [vmem:[%s1] sm:$0xf]
      %v316 = vld [vmem:[%s2] sm:$0x1]
      %v318 = vperm.slane %v316, 0
      %v352 = vunpack.c.l.b16 %v283
      %v353 = vunpack.c.l.b16 %v284
      %v354 = vunpack.c.l.b16 %v285
      %v355 = vunpack.c.l.b16 %v286
      %v356 = vunpack.c.l.b16 %v287
      %v357 = vunpack.c.l.b16 %v288
      %v358 = vunpack.c.l.b16 %v289
      %v359 = vunpack.c.l.b16 %v290
      %v360 = vunpack.c.l.b16 %v291
      %v361 = vunpack.c.l.b16 %v292
      %v362 = vunpack.c.l.b16 %v293
      %v363 = vunpack.c.l.b16 %v294
      %v364 = vunpack.c.l.b16 %v295
      %v365 = vunpack.c.l.b16 %v296
      %v366 = vunpack.c.l.b16 %v297
      %v367 = vunpack.c.l.b16 %v298
      %v368 = vunpack.c.l.b16 %v299
      %v369 = vunpack.c.l.b16 %v300
      %v370 = vunpack.c.l.b16 %v301
      %v371 = vunpack.c.l.b16 %v302
      %v372 = vunpack.c.l.b16 %v303
      %v373 = vunpack.c.l.b16 %v304
      %v374 = vunpack.c.l.b16 %v305
      %v375 = vunpack.c.l.b16 %v306
      %v376 = vunpack.c.l.b16 %v307
      %v377 = vunpack.c.l.b16 %v308
      %v378 = vunpack.c.l.b16 %v309
      %v379 = vunpack.c.l.b16 %v310
      %v380 = vunpack.c.l.b16 %v311
      %v381 = vunpack.c.l.b16 %v312
      %v382 = vunpack.c.l.b16 %v313
      %v383 = vunpack.c.l.b16 %v314
      %v384 = vpack.c.b16 %v353, %v352
      %v385 = vpack.c.b16 %v355, %v354
      %v386 = vpack.c.b16 %v357, %v356
      %v387 = vpack.c.b16 %v359, %v358
      %v388 = vpack.c.b16 %v361, %v360
      %v389 = vpack.c.b16 %v363, %v362
      %v390 = vpack.c.b16 %v365, %v364
      %v391 = vpack.c.b16 %v367, %v366
      %v392 = vpack.c.b16 %v369, %v368
      %v393 = vpack.c.b16 %v371, %v370
      %v394 = vpack.c.b16 %v373, %v372
      %v395 = vpack.c.b16 %v375, %v374
      %v396 = vpack.c.b16 %v377, %v376
      %v397 = vpack.c.b16 %v379, %v378
      %v398 = vpack.c.b16 %v381, %v380
      %v399 = vpack.c.b16 %v383, %v382
      %vm400 = vcmask 64512
      %v402 = vsel %vm400, %v384, 0
      %v405 = vsel %vm400, %v385, 0
      %v408 = vsel %vm400, %v386, 0
      %v411 = vsel %vm400, %v387, 0
      %v414 = vsel %vm400, %v388, 0
      %v417 = vsel %vm400, %v389, 0
      %v420 = vsel %vm400, %v390, 0
      %v423 = vsel %vm400, %v391, 0
      %v426 = vsel %vm400, %v392, 0
      %v429 = vsel %vm400, %v393, 0
      %v432 = vsel %vm400, %v394, 0
      %v435 = vsel %vm400, %v395, 0
      %v438 = vsel %vm400, %v396, 0
      %v441 = vsel %vm400, %v397, 0
      %v444 = vsel %vm400, %v398, 0
      %v447 = vsel %vm400, %v399, 0
      %vm449 = vcmask 1043456
      %v451 = vsel %vm449, %v315, 0
      %453 = vmatpush.bf16.msra.mxu0 0
      %454 = vmatpush.bf16.msra.mxu0 0
      %455 = vmatpush.bf16.msra.mxu0 0
      %456 = vmatpush.bf16.msra.mxu0 0
      %457 = vmatpush.bf16.msra.mxu0 0
      %458 = vmatpush.bf16.msra.mxu0 0
      %459 = vmatpush.bf16.msra.mxu0 0
      %460 = vmatpush.bf16.msra.mxu0 %v451
      %461 = vmatmul.bf16.gmra.mxu0 %v402
      %v462 = vpop.f32.mrf.mxu0
      %v463 = vadd.f32 %v318, %v462
      %v464 = vpop.f32.mrf.mxu0
      %v465 = vadd.f32 %v318, %v464
      %466 = vmatmul.bf16.gmra.mxu0 %v405
      %v467 = vpop.f32.mrf.mxu0
      %v468 = vadd.f32 %v318, %v467
      %v469 = vpop.f32.mrf.mxu0
      %v470 = vadd.f32 %v318, %v469
      %471 = vmatmul.bf16.gmra.mxu0 %v408
      %v472 = vpop.f32.mrf.mxu0
      %v473 = vadd.f32 %v318, %v472
      %v474 = vpop.f32.mrf.mxu0
      %v475 = vadd.f32 %v318, %v474
      %476 = vmatmul.bf16.gmra.mxu0 %v411
      %v477 = vpop.f32.mrf.mxu0
      %v478 = vadd.f32 %v318, %v477
      %v479 = vpop.f32.mrf.mxu0
      %v480 = vadd.f32 %v318, %v479
      %481 = vmatmul.bf16.gmra.mxu0 %v414
      %v482 = vpop.f32.mrf.mxu0
      %v483 = vadd.f32 %v318, %v482
      %v484 = vpop.f32.mrf.mxu0
      %v485 = vadd.f32 %v318, %v484
      %486 = vmatmul.bf16.gmra.mxu0 %v417
      %v487 = vpop.f32.mrf.mxu0
      %v488 = vadd.f32 %v318, %v487
      %v489 = vpop.f32.mrf.mxu0
      %v490 = vadd.f32 %v318, %v489
      %491 = vmatmul.bf16.gmra.mxu0 %v420
      %v492 = vpop.f32.mrf.mxu0
      %v493 = vadd.f32 %v318, %v492
      %v494 = vpop.f32.mrf.mxu0
      %v495 = vadd.f32 %v318, %v494
      %496 = vmatmul.bf16.gmra.mxu0 %v423
      %v497 = vpop.f32.mrf.mxu0
      %v498 = vadd.f32 %v318, %v497
      %v499 = vpop.f32.mrf.mxu0
      %v500 = vadd.f32 %v318, %v499
      %501 = vmatmul.bf16.gmra.mxu0 %v426
      %v502 = vpop.f32.mrf.mxu0
      %v503 = vadd.f32 %v318, %v502
      %v504 = vpop.f32.mrf.mxu0
      %v505 = vadd.f32 %v318, %v504
      %506 = vmatmul.bf16.gmra.mxu0 %v429
      %v507 = vpop.f32.mrf.mxu0
      %v508 = vadd.f32 %v318, %v507
      %v509 = vpop.f32.mrf.mxu0
      %v510 = vadd.f32 %v318, %v509
      %511 = vmatmul.bf16.gmra.mxu0 %v432
      %v512 = vpop.f32.mrf.mxu0
      %v513 = vadd.f32 %v318, %v512
      %v514 = vpop.f32.mrf.mxu0
      %v515 = vadd.f32 %v318, %v514
      %516 = vmatmul.bf16.gmra.mxu0 %v435
      %v517 = vpop.f32.mrf.mxu0
      %v518 = vadd.f32 %v318, %v517
      %v519 = vpop.f32.mrf.mxu0
      %v520 = vadd.f32 %v318, %v519
      %521 = vmatmul.bf16.gmra.mxu0 %v438
      %v522 = vpop.f32.mrf.mxu0
      %v523 = vadd.f32 %v318, %v522
      %v524 = vpop.f32.mrf.mxu0
      %v525 = vadd.f32 %v318, %v524
      %526 = vmatmul.bf16.gmra.mxu0 %v441
      %v527 = vpop.f32.mrf.mxu0
      %v528 = vadd.f32 %v318, %v527
      %v529 = vpop.f32.mrf.mxu0
      %v530 = vadd.f32 %v318, %v529
      %531 = vmatmul.bf16.gmra.mxu0 %v444
      %v532 = vpop.f32.mrf.mxu0
      %v533 = vadd.f32 %v318, %v532
      %v534 = vpop.f32.mrf.mxu0
      %v535 = vadd.f32 %v318, %v534
      %536 = vmatmul.bf16.gmra.mxu0 %v447
      %v537 = vpop.f32.mrf.mxu0
      %v538 = vadd.f32 %v318, %v537
      %v539 = vpop.f32.mrf.mxu0
      %v540 = vadd.f32 %v318, %v539
      %541 = vdwg.mxu0
      %v542 = vmax.f32 %v463, 0.0
      %v543 = vmax.f32 %v465, 0.0
      %v544 = vmax.f32 %v468, 0.0
      %v545 = vmax.f32 %v470, 0.0
      %v546 = vmax.f32 %v473, 0.0
      %v547 = vmax.f32 %v475, 0.0
      %v548 = vmax.f32 %v478, 0.0
      %v549 = vmax.f32 %v480, 0.0
      %v550 = vmax.f32 %v483, 0.0
      %v551 = vmax.f32 %v485, 0.0
      %v552 = vmax.f32 %v488, 0.0
      %v553 = vmax.f32 %v490, 0.0
      %v554 = vmax.f32 %v493, 0.0
      %v555 = vmax.f32 %v495, 0.0
      %v556 = vmax.f32 %v498, 0.0
      %v557 = vmax.f32 %v500, 0.0
      %v558 = vmax.f32 %v503, 0.0
      %v559 = vmax.f32 %v505, 0.0
      %v560 = vmax.f32 %v508, 0.0
      %v561 = vmax.f32 %v510, 0.0
      %v562 = vmax.f32 %v513, 0.0
      %v563 = vmax.f32 %v515, 0.0
      %v564 = vmax.f32 %v518, 0.0
      %v565 = vmax.f32 %v520, 0.0
      %v566 = vmax.f32 %v523, 0.0
      %v567 = vmax.f32 %v525, 0.0
      %v568 = vmax.f32 %v528, 0.0
      %v569 = vmax.f32 %v530, 0.0
      %v570 = vmax.f32 %v533, 0.0
      %v571 = vmax.f32 %v535, 0.0
      %v572 = vmax.f32 %v538, 0.0
      %v573 = vmax.f32 %v540, 0.0
      %v574 = vpack.c.bf16 %v543, %v542
      %v575 = vpack.c.bf16 %v545, %v544
      %v576 = vpack.c.bf16 %v547, %v546
      %v577 = vpack.c.bf16 %v549, %v548
      %v578 = vpack.c.bf16 %v551, %v550
      %v579 = vpack.c.bf16 %v553, %v552
      %v580 = vpack.c.bf16 %v555, %v554
      %v581 = vpack.c.bf16 %v557, %v556
      %v582 = vpack.c.bf16 %v559, %v558
      %v583 = vpack.c.bf16 %v561, %v560
      %v584 = vpack.c.bf16 %v563, %v562
      %v585 = vpack.c.bf16 %v565, %v564
      %v586 = vpack.c.bf16 %v567, %v566
      %v587 = vpack.c.bf16 %v569, %v568
      %v588 = vpack.c.bf16 %v571, %v570
      %v589 = vpack.c.bf16 %v573, %v572
      %v590 = vld [vmem:[%s3] sm:$0xf]
      %v591 = vld [vmem:[%s3 + $0x4] sm:$0xf]
      %v592 = vld [vmem:[%s3 + $0x8] sm:$0xf]
      %v593 = vld [vmem:[%s3 + $0xc] sm:$0xf]
      %v594 = vld [vmem:[%s3 + $0x10] sm:$0xf]
      %v595 = vld [vmem:[%s3 + $0x14] sm:$0xf]
      %v596 = vld [vmem:[%s3 + $0x18] sm:$0xf]
      %v597 = vld [vmem:[%s3 + $0x1c] sm:$0xf]
      %v598 = vld [vmem:[%s4] sm:$0x1]
      %v600 = vperm.slane %v598, 0
      %v610 = vunpack.c.l.b16 %v590
      %v611 = vunpack.c.l.b16 %v591
      %v612 = vunpack.c.l.b16 %v592
      %v613 = vunpack.c.l.b16 %v593
      %v614 = vunpack.c.l.b16 %v594
      %v615 = vunpack.c.l.b16 %v595
      %v616 = vunpack.c.l.b16 %v596
      %v617 = vunpack.c.l.b16 %v597
      %v618 = vpack.c.b16 %v611, %v610
      %v619 = vpack.c.b16 %v613, %v612
      %v620 = vpack.c.b16 %v615, %v614
      %v621 = vpack.c.b16 %v617, %v616
      %vm626 = vcmask 523264
      %v628 = vsel %vm626, %v574, 0
      %v631 = vsel %vm626, %v575, 0
      %v634 = vsel %vm626, %v576, 0
      %v637 = vsel %vm626, %v577, 0
      %v640 = vsel %vm626, %v578, 0
      %v643 = vsel %vm626, %v579, 0
      %v646 = vsel %vm626, %v580, 0
      %v649 = vsel %vm626, %v581, 0
      %v652 = vsel %vm626, %v582, 0
      %v655 = vsel %vm626, %v583, 0
      %v658 = vsel %vm626, %v584, 0
      %v661 = vsel %vm626, %v585, 0
      %v664 = vsel %vm626, %v586, 0
      %v667 = vsel %vm626, %v587, 0
      %v670 = vsel %vm626, %v588, 0
      %v673 = vsel %vm626, %v589, 0
      %675 = vmatpush.bf16.msra.mxu0 0
      %676 = vmatpush.bf16.msra.mxu0 0
      %677 = vmatpush.bf16.msra.mxu0 0
      %678 = vmatpush.bf16.msra.mxu0 0
      %679 = vmatpush.bf16.msra.mxu0 %v621
      %680 = vmatpush.bf16.msra.mxu0 %v620
      %681 = vmatpush.bf16.msra.mxu0 %v619
      %682 = vmatpush.bf16.msra.mxu0 %v618
      %683 = vmatmul.bf16.gmra.mxu0 %v628
      %v684 = vpop.f32.mrf.mxu0
      %v685 = vadd.f32 %v600, %v684
      %v686 = vpop.f32.mrf.mxu0
      %v687 = vadd.f32 %v600, %v686
      %688 = vmatmul.bf16.gmra.mxu0 %v631
      %v689 = vpop.f32.mrf.mxu0
      %v690 = vadd.f32 %v600, %v689
      %v691 = vpop.f32.mrf.mxu0
      %v692 = vadd.f32 %v600, %v691
      %693 = vmatmul.bf16.gmra.mxu0 %v634
      %v694 = vpop.f32.mrf.mxu0
      %v695 = vadd.f32 %v600, %v694
      %v696 = vpop.f32.mrf.mxu0
      %v697 = vadd.f32 %v600, %v696
      %698 = vmatmul.bf16.gmra.mxu0 %v637
      %v699 = vpop.f32.mrf.mxu0
      %v700 = vadd.f32 %v600, %v699
      %v701 = vpop.f32.mrf.mxu0
      %v702 = vadd.f32 %v600, %v701
      %703 = vmatmul.bf16.gmra.mxu0 %v640
      %v704 = vpop.f32.mrf.mxu0
      %v705 = vadd.f32 %v600, %v704
      %v706 = vpop.f32.mrf.mxu0
      %v707 = vadd.f32 %v600, %v706
      %708 = vmatmul.bf16.gmra.mxu0 %v643
      %v709 = vpop.f32.mrf.mxu0
      %v710 = vadd.f32 %v600, %v709
      %v711 = vpop.f32.mrf.mxu0
      %v712 = vadd.f32 %v600, %v711
      %713 = vmatmul.bf16.gmra.mxu0 %v646
      %v714 = vpop.f32.mrf.mxu0
      %v715 = vadd.f32 %v600, %v714
      %v716 = vpop.f32.mrf.mxu0
      %v717 = vadd.f32 %v600, %v716
      %718 = vmatmul.bf16.gmra.mxu0 %v649
      %v719 = vpop.f32.mrf.mxu0
      %v720 = vadd.f32 %v600, %v719
      %v721 = vpop.f32.mrf.mxu0
      %v722 = vadd.f32 %v600, %v721
      %723 = vmatmul.bf16.gmra.mxu0 %v652
      %v724 = vpop.f32.mrf.mxu0
      %v725 = vadd.f32 %v600, %v724
      %v726 = vpop.f32.mrf.mxu0
      %v727 = vadd.f32 %v600, %v726
      %728 = vmatmul.bf16.gmra.mxu0 %v655
      %v729 = vpop.f32.mrf.mxu0
      %v730 = vadd.f32 %v600, %v729
      %v731 = vpop.f32.mrf.mxu0
      %v732 = vadd.f32 %v600, %v731
      %733 = vmatmul.bf16.gmra.mxu0 %v658
      %v734 = vpop.f32.mrf.mxu0
      %v735 = vadd.f32 %v600, %v734
      %v736 = vpop.f32.mrf.mxu0
      %v737 = vadd.f32 %v600, %v736
      %738 = vmatmul.bf16.gmra.mxu0 %v661
      %v739 = vpop.f32.mrf.mxu0
      %v740 = vadd.f32 %v600, %v739
      %v741 = vpop.f32.mrf.mxu0
      %v742 = vadd.f32 %v600, %v741
      %743 = vmatmul.bf16.gmra.mxu0 %v664
      %v744 = vpop.f32.mrf.mxu0
      %v745 = vadd.f32 %v600, %v744
      %v746 = vpop.f32.mrf.mxu0
      %v747 = vadd.f32 %v600, %v746
      %748 = vmatmul.bf16.gmra.mxu0 %v667
      %v749 = vpop.f32.mrf.mxu0
      %v750 = vadd.f32 %v600, %v749
      %v751 = vpop.f32.mrf.mxu0
      %v752 = vadd.f32 %v600, %v751
      %753 = vmatmul.bf16.gmra.mxu0 %v670
      %v754 = vpop.f32.mrf.mxu0
      %v755 = vadd.f32 %v600, %v754
      %v756 = vpop.f32.mrf.mxu0
      %v757 = vadd.f32 %v600, %v756
      %758 = vmatmul.bf16.gmra.mxu0 %v673
      %v759 = vpop.f32.mrf.mxu0
      %v760 = vadd.f32 %v600, %v759
      %v761 = vpop.f32.mrf.mxu0
      %v762 = vadd.f32 %v600, %v761
      %763 = vdwg.mxu0
      %v764 = vmax.f32 %v685, 0.0
      %v765 = vmax.f32 %v687, 0.0
      %v766 = vmax.f32 %v690, 0.0
      %v767 = vmax.f32 %v692, 0.0
      %v768 = vmax.f32 %v695, 0.0
      %v769 = vmax.f32 %v697, 0.0
      %v770 = vmax.f32 %v700, 0.0
      %v771 = vmax.f32 %v702, 0.0
      %v772 = vmax.f32 %v705, 0.0
      %v773 = vmax.f32 %v707, 0.0
      %v774 = vmax.f32 %v710, 0.0
      %v775 = vmax.f32 %v712, 0.0
      %v776 = vmax.f32 %v715, 0.0
      %v777 = vmax.f32 %v717, 0.0
      %v778 = vmax.f32 %v720, 0.0
      %v779 = vmax.f32 %v722, 0.0
      %v780 = vmax.f32 %v725, 0.0
      %v781 = vmax.f32 %v727, 0.0
      %v782 = vmax.f32 %v730, 0.0
      %v783 = vmax.f32 %v732, 0.0
      %v784 = vmax.f32 %v735, 0.0
      %v785 = vmax.f32 %v737, 0.0
      %v786 = vmax.f32 %v740, 0.0
      %v787 = vmax.f32 %v742, 0.0
      %v788 = vmax.f32 %v745, 0.0
      %v789 = vmax.f32 %v747, 0.0
      %v790 = vmax.f32 %v750, 0.0
      %v791 = vmax.f32 %v752, 0.0
      %v792 = vmax.f32 %v755, 0.0
      %v793 = vmax.f32 %v757, 0.0
      %v794 = vmax.f32 %v760, 0.0
      %v795 = vmax.f32 %v762, 0.0
      %v796 = vpack.c.bf16 %v765, %v764
      %v797 = vpack.c.bf16 %v767, %v766
      %v798 = vpack.c.bf16 %v769, %v768
      %v799 = vpack.c.bf16 %v771, %v770
      %v800 = vpack.c.bf16 %v773, %v772
      %v801 = vpack.c.bf16 %v775, %v774
      %v802 = vpack.c.bf16 %v777, %v776
      %v803 = vpack.c.bf16 %v779, %v778
      %v804 = vpack.c.bf16 %v781, %v780
      %v805 = vpack.c.bf16 %v783, %v782
      %v806 = vpack.c.bf16 %v785, %v784
      %v807 = vpack.c.bf16 %v787, %v786
      %v808 = vpack.c.bf16 %v789, %v788
      %v809 = vpack.c.bf16 %v791, %v790
      %v810 = vpack.c.bf16 %v793, %v792
      %v811 = vpack.c.bf16 %v795, %v794
      %v812 = vld [vmem:[%s5] sm:$0xf]
      %v813 = vld [vmem:[%s5 + $0x4] sm:$0xf]
      %v814 = vld [vmem:[%s5 + $0x8] sm:$0xf]
      %v815 = vld [vmem:[%s5 + $0xc] sm:$0xf]
      %v816 = vld [vmem:[%s5 + $0x10] sm:$0xf]
      %v817 = vld [vmem:[%s5 + $0x14] sm:$0xf]
      %v818 = vld [vmem:[%s5 + $0x18] sm:$0xf]
      %v819 = vld [vmem:[%s5 + $0x1c] sm:$0xf]
      %v820 = vld [vmem:[%s6] sm:$0x1]
      %v822 = vperm.slane %v820, 0
      %v832 = vunpack.c.l.b16 %v812
      %v833 = vunpack.c.l.b16 %v813
      %v834 = vunpack.c.l.b16 %v814
      %v835 = vunpack.c.l.b16 %v815
      %v836 = vunpack.c.l.b16 %v816
      %v837 = vunpack.c.l.b16 %v817
      %v838 = vunpack.c.l.b16 %v818
      %v839 = vunpack.c.l.b16 %v819
      %v840 = vpack.c.b16 %v833, %v832
      %v841 = vpack.c.b16 %v835, %v834
      %v842 = vpack.c.b16 %v837, %v836
      %v843 = vpack.c.b16 %v839, %v838
      %v849 = vsel %vm626, %v796, 0
      %v852 = vsel %vm626, %v797, 0
      %v855 = vsel %vm626, %v798, 0
      %v858 = vsel %vm626, %v799, 0
      %v861 = vsel %vm626, %v800, 0
      %v864 = vsel %vm626, %v801, 0
      %v867 = vsel %vm626, %v802, 0
      %v870 = vsel %vm626, %v803, 0
      %v873 = vsel %vm626, %v804, 0
      %v876 = vsel %vm626, %v805, 0
      %v879 = vsel %vm626, %v806, 0
      %v882 = vsel %vm626, %v807, 0
      %v885 = vsel %vm626, %v808, 0
      %v888 = vsel %vm626, %v809, 0
      %v891 = vsel %vm626, %v810, 0
      %v894 = vsel %vm626, %v811, 0
      %896 = vmatpush.bf16.msra.mxu0 0
      %897 = vmatpush.bf16.msra.mxu0 0
      %898 = vmatpush.bf16.msra.mxu0 0
      %899 = vmatpush.bf16.msra.mxu0 0
      %900 = vmatpush.bf16.msra.mxu0 %v843
      %901 = vmatpush.bf16.msra.mxu0 %v842
      %902 = vmatpush.bf16.msra.mxu0 %v841
      %903 = vmatpush.bf16.msra.mxu0 %v840
      %904 = vmatmul.bf16.gmra.mxu0 %v849
      %v905 = vpop.f32.mrf.mxu0
      %v906 = vadd.f32 %v822, %v905
      %v907 = vpop.f32.mrf.mxu0
      %v908 = vadd.f32 %v822, %v907
      %909 = vmatmul.bf16.gmra.mxu0 %v852
      %v910 = vpop.f32.mrf.mxu0
      %v911 = vadd.f32 %v822, %v910
      %v912 = vpop.f32.mrf.mxu0
      %v913 = vadd.f32 %v822, %v912
      %914 = vmatmul.bf16.gmra.mxu0 %v855
      %v915 = vpop.f32.mrf.mxu0
      %v916 = vadd.f32 %v822, %v915
      %v917 = vpop.f32.mrf.mxu0
      %v918 = vadd.f32 %v822, %v917
      %919 = vmatmul.bf16.gmra.mxu0 %v858
      %v920 = vpop.f32.mrf.mxu0
      %v921 = vadd.f32 %v822, %v920
      %v922 = vpop.f32.mrf.mxu0
      %v923 = vadd.f32 %v822, %v922
      %924 = vmatmul.bf16.gmra.mxu0 %v861
      %v925 = vpop.f32.mrf.mxu0
      %v926 = vadd.f32 %v822, %v925
      %v927 = vpop.f32.mrf.mxu0
      %v928 = vadd.f32 %v822, %v927
      %929 = vmatmul.bf16.gmra.mxu0 %v864
      %v930 = vpop.f32.mrf.mxu0
      %v931 = vadd.f32 %v822, %v930
      %v932 = vpop.f32.mrf.mxu0
      %v933 = vadd.f32 %v822, %v932
      %934 = vmatmul.bf16.gmra.mxu0 %v867
      %v935 = vpop.f32.mrf.mxu0
      %v936 = vadd.f32 %v822, %v935
      %v937 = vpop.f32.mrf.mxu0
      %v938 = vadd.f32 %v822, %v937
      %939 = vmatmul.bf16.gmra.mxu0 %v870
      %v940 = vpop.f32.mrf.mxu0
      %v941 = vadd.f32 %v822, %v940
      %v942 = vpop.f32.mrf.mxu0
      %v943 = vadd.f32 %v822, %v942
      %944 = vmatmul.bf16.gmra.mxu0 %v873
      %v945 = vpop.f32.mrf.mxu0
      %v946 = vadd.f32 %v822, %v945
      %v947 = vpop.f32.mrf.mxu0
      %v948 = vadd.f32 %v822, %v947
      %949 = vmatmul.bf16.gmra.mxu0 %v876
      %v950 = vpop.f32.mrf.mxu0
      %v951 = vadd.f32 %v822, %v950
      %v952 = vpop.f32.mrf.mxu0
      %v953 = vadd.f32 %v822, %v952
      %954 = vmatmul.bf16.gmra.mxu0 %v879
      %v955 = vpop.f32.mrf.mxu0
      %v956 = vadd.f32 %v822, %v955
      %v957 = vpop.f32.mrf.mxu0
      %v958 = vadd.f32 %v822, %v957
      %959 = vmatmul.bf16.gmra.mxu0 %v882
      %v960 = vpop.f32.mrf.mxu0
      %v961 = vadd.f32 %v822, %v960
      %v962 = vpop.f32.mrf.mxu0
      %v963 = vadd.f32 %v822, %v962
      %964 = vmatmul.bf16.gmra.mxu0 %v885
      %v965 = vpop.f32.mrf.mxu0
      %v966 = vadd.f32 %v822, %v965
      %v967 = vpop.f32.mrf.mxu0
      %v968 = vadd.f32 %v822, %v967
      %969 = vmatmul.bf16.gmra.mxu0 %v888
      %v970 = vpop.f32.mrf.mxu0
      %v971 = vadd.f32 %v822, %v970
      %v972 = vpop.f32.mrf.mxu0
      %v973 = vadd.f32 %v822, %v972
      %974 = vmatmul.bf16.gmra.mxu0 %v891
      %v975 = vpop.f32.mrf.mxu0
      %v976 = vadd.f32 %v822, %v975
      %v977 = vpop.f32.mrf.mxu0
      %v978 = vadd.f32 %v822, %v977
      %979 = vmatmul.bf16.gmra.mxu0 %v894
      %v980 = vpop.f32.mrf.mxu0
      %v981 = vadd.f32 %v822, %v980
      %v982 = vpop.f32.mrf.mxu0
      %v983 = vadd.f32 %v822, %v982
      %984 = vdwg.mxu0
      %985 = vst [vmem:[%s280] sm:$0xff] %v906
      %986 = vst [vmem:[%s280 + $0x8] sm:$0xff] %v908
      %987 = vst [vmem:[%s280 + $0x10] sm:$0xff] %v911
      %988 = vst [vmem:[%s280 + $0x18] sm:$0xff] %v913
      %989 = vst [vmem:[%s280 + $0x20] sm:$0xff] %v916
      %990 = vst [vmem:[%s280 + $0x28] sm:$0xff] %v918
      %991 = vst [vmem:[%s280 + $0x30] sm:$0xff] %v921
      %992 = vst [vmem:[%s280 + $0x38] sm:$0xff] %v923
      %993 = vst [vmem:[%s280 + $0x40] sm:$0xff] %v926
      %994 = vst [vmem:[%s280 + $0x48] sm:$0xff] %v928
      %995 = vst [vmem:[%s280 + $0x50] sm:$0xff] %v931
      %996 = vst [vmem:[%s280 + $0x58] sm:$0xff] %v933
      %997 = vst [vmem:[%s280 + $0x60] sm:$0xff] %v936
      %998 = vst [vmem:[%s280 + $0x68] sm:$0xff] %v938
      %999 = vst [vmem:[%s280 + $0x70] sm:$0xff] %v941
      %1000 = vst [vmem:[%s280 + $0x78] sm:$0xff] %v943
      %1001 = vst [vmem:[%s280 + $0x80] sm:$0xff] %v946
      %1002 = vst [vmem:[%s280 + $0x88] sm:$0xff] %v948
      %1003 = vst [vmem:[%s280 + $0x90] sm:$0xff] %v951
      %1004 = vst [vmem:[%s280 + $0x98] sm:$0xff] %v953
      %1005 = vst [vmem:[%s280 + $0xa0] sm:$0xff] %v956
      %1006 = vst [vmem:[%s280 + $0xa8] sm:$0xff] %v958
      %1007 = vst [vmem:[%s280 + $0xb0] sm:$0xff] %v961
      %1008 = vst [vmem:[%s280 + $0xb8] sm:$0xff] %v963
      %1009 = vst [vmem:[%s280 + $0xc0] sm:$0xff] %v966
      %1010 = vst [vmem:[%s280 + $0xc8] sm:$0xff] %v968
      %1011 = vst [vmem:[%s280 + $0xd0] sm:$0xff] %v971
      %1012 = vst [vmem:[%s280 + $0xd8] sm:$0xff] %v973
      %1013 = vst [vmem:[%s280 + $0xe0] sm:$0xff] %v976
      %1014 = vst [vmem:[%s280 + $0xe8] sm:$0xff] %v978
      %1015 = vst [vmem:[%s280 + $0xf0] sm:$0xff] %v981
      %1016 = vst [vmem:[%s280 + $0xf8] sm:$0xff] %v983
      %s1017 = smul.u32 32, %s18
      %p1018 = scmp.lt.s32.totalorder %s1017, 63
      %s1019 = scalar_select %p1018, %s1017, 63
      %s1020 = smul.addr %s1019, 8
      %s1021 = scalar_lea.vmem %s7, %s1020
      // Predicated region
      $region49: #{qnetwork_forward.1} parent=47 // pred_check
        %p1022 = pneg %p188
      $region50: #{qnetwork_forward.1} parent=47 // pred_check_branch
        %1024 = sbr.rel (%p1022) target = $region52
      $region51: #{qnetwork_forward.1} parent=47 // pred_region
        %s1025 = smul.u32 32, %s18
      $region52: #{qnetwork_forward.1} parent=47 // pred_fallthru
        _
    $region48: #{qnetwork_forward.1} parent=5 // pred_fallthru
      _
    %p1026 = scmp.le.s32.totalorder 2, %s13
    // Predicated region
    $region53: #{qnetwork_forward.1} parent=5 // pred_check
      %p1027 = pneg %p1026
    $region54: #{qnetwork_forward.1} parent=5 // pred_check_branch
      %1029 = sbr.rel (%p1027) target = $region56
    $region55: #{qnetwork_forward.1} parent=5 // pred_region
      %s1030 = ssub.s32 %s13, 2
      // Predicated region
      $region57: #{qnetwork_forward.1} parent=55 // pred_check
        %p1031 = pneg %p194
      $region58: #{qnetwork_forward.1} parent=55 // pred_check_branch
        %1033 = sbr.rel (%p1031) target = $region60
      $region59: #{qnetwork_forward.1} parent=55 // pred_region
        %s1034 = smul.u32 32, %s19
        %p1035 = scmp.lt.s32.totalorder %s1034, 63
        %s1036 = scalar_select %p1035, %s1034, 63
        %s1037 = smul.addr %s1036, 8
        %s1038 = scalar_lea.vmem %s7, %s1037
      $region60: #{qnetwork_forward.1} parent=55 // pred_fallthru
        _
    $region56: #{qnetwork_forward.1} parent=5 // pred_fallthru
      _
  $region6: #{qnetwork_forward.1} parent=0 // loop_footer
    %s17 = sadd.s32 1, %s13
  $region7: #{qnetwork_forward.1} parent=0 // loop_footer_branch
    %12 = sbr.rel target = $region3
  $region8: #{qnetwork_forward.1} parent=0 // loop_exit
    _

</llo_original>
